<compile_context>
chip_gen: v7x
topology: tpu7x:2x2x1
jax: 0.10.0
libtpu: 0.0.40
codegen_flags: <defaults>
</compile_context>

<pallas_src>
import functools

import jax
import jax.numpy as jnp
from jax.experimental import pallas as pl
from jax.experimental.pallas import tpu as pltpu


def _ddn_loss_kernel(logits_ref, dw_ref, out_ref, *,
                     alpha, gamma, depth_min, depth_max, num_bins, hw, tp):
    """One pixel tile: LID binning, target-class focal loss, weighted partial sum."""
    logits = logits_ref[0].astype(jnp.float32)     # (C, TP) classes on sublanes
    dw = dw_ref[0].astype(jnp.float32)             # (2, TP)
    d = dw[0:1, :]                                 # (1, TP) target depth
    w = dw[1:2, :]                                 # (1, TP) fg/bg weight

    # Lane-validity mask for the ragged tail (the last tile may read lanes past
    # H*W). Do NOT rely on w == 0 there — out-of-bounds data can be inf/NaN.
    pix0 = pl.program_id(1) * tp
    lane_idx = jax.lax.broadcasted_iota(jnp.int32, (1, tp), 1)
    valid = (pix0 + lane_idx) < hw                 # (1, TP) bool

    # --- bin_depths, mode='LID', target=True ---
    bin_size = 2.0 * (depth_max - depth_min) / (num_bins * (1 + num_bins))
    idx = -0.5 + 0.5 * jnp.sqrt(1.0 + 8.0 * (d - depth_min) / bin_size)
    bad = (idx < 0) | (idx > num_bins) | ~jnp.isfinite(idx)
    tgt = jnp.where(bad, jnp.float32(num_bins), idx).astype(jnp.int32)   # (1, TP)

    # --- log-softmax over the class (sublane) axis: only full-tile transcendental ---
    m = jnp.max(logits, axis=0, keepdims=True)               # (1, TP)
    e = jnp.exp(logits - m)                                   # (C, TP)
    s = jnp.sum(e, axis=0, keepdims=True)                     # (1, TP)

    # Target-class logit via select-reduce: only a (C, 1) iota, no (C, TP)
    # int32 iota / f32 one-hot temporaries.
    class_ids = jax.lax.broadcasted_iota(jnp.int32, (logits.shape[0], 1), 0)
    logit_t = jnp.sum(jnp.where(class_ids == tgt, logits, 0.0),
                      axis=0, keepdims=True)                  # (1, TP)

    # kornia-style focal loss evaluated at the target class only
    log_p_t = (logit_t - m) - jnp.log(s)                      # (1, TP)
    p_t = jnp.exp(log_p_t)
    one_minus = jnp.maximum(1.0 - p_t, 0.0)
    if gamma == 2.0:
        mod = one_minus * one_minus
    else:
        # TODO(synk): jnp.power(1-p_t, gamma) has inf/NaN gradients as p_t->1 for
        # some gamma; fine for this forward-only value.
        mod = jnp.power(one_minus, gamma)
    pix_loss = -alpha * mod * log_p_t                         # (1, TP)

    # Weighted partial sum for this tile (Balancer numerator); mask BEFORE the
    # lane reduction so OOB garbage never reaches the accumulator.
    part = jnp.sum(jnp.where(valid, pix_loss * w, 0.0), keepdims=True)   # (1, 1)
    out_ref[...] = jnp.broadcast_to(part[None], out_ref.shape)           # full (8,128) store


class DDNLossPallas:
    """JAX/Pallas re-implementation of otx DDNLoss.forward (forward pass only)."""

    # TODO(synk): training use needs a custom VJP (analytic dlogits kernel:
    # one more streaming pass producing alpha*w*(softmax-based) gradients);
    # jax.grad through this pallas_call is not provided.

    def __init__(self, alpha=0.25, gamma=2.0, fg_weight=13.0, bg_weight=1.0,
                 downsample_factor=1, depth_min=1e-3, depth_max=60.0, num_bins=80):
        self.alpha = float(alpha)
        self.gamma = float(gamma)
        self.fg_weight = float(fg_weight)
        self.bg_weight = float(bg_weight)
        self.downsample_factor = downsample_factor
        self.depth_min = float(depth_min)
        self.depth_max = float(depth_max)
        self.num_bins = int(num_bins)

    # ---- glue: irregular per-box painting (no clean Pallas equivalent) ----
    def _build_targets(self, gt_boxes2d, gt_center_depth, num_gt_per_img, b, h, w):
        # TODO(synk): num_gt_per_img is a single static int shared by all images;
        # per-image variable box counts (list form of the torch API) not supported.
        # Reproduce the in-place rounding sequence of the torch code.
        boxes_r = jnp.concatenate(
            [jnp.floor(gt_boxes2d[:, :2]), jnp.ceil(gt_boxes2d[:, 2:])], axis=1)
        boxes_depth = boxes_r.astype(jnp.int32).reshape(b, num_gt_per_img, 4)

        boxes_fg_f = boxes_r / self.downsample_factor
        boxes_fg = jnp.concatenate(
            [jnp.floor(boxes_fg_f[:, :2]), jnp.ceil(boxes_fg_f[:, 2:])], axis=1
        ).astype(jnp.int32).reshape(b, num_gt_per_img, 4)

        depths = gt_center_depth.reshape(b, num_gt_per_img)
        order = jnp.argsort(-depths, axis=1)                    # descending
        depths_sorted = jnp.take_along_axis(depths, order, axis=1)
        boxes_sorted = jnp.take_along_axis(boxes_depth, order[..., None], axis=1)

        vv = jnp.arange(h, dtype=jnp.int32)[None, :, None]      # (1, H, 1)
        uu = jnp.arange(w, dtype=jnp.int32)[None, None, :]      # (1, 1, W)

        depth_maps = jnp.zeros((b, h, w), jnp.float32)
        fg_mask = jnp.zeros((b, h, w), bool)
        for n in range(num_gt_per_img):
            u1, v1, u2, v2 = (boxes_sorted[:, n, k][:, None, None] for k in range(4))
            inside = (vv >= v1) & (vv < v2) & (uu >= u1) & (uu < u2)
            depth_maps = jnp.where(inside, depths_sorted[:, n][:, None, None],
                                   depth_maps)
            fu1, fv1, fu2, fv2 = (boxes_fg[:, n, k][:, None, None] for k in range(4))
            fg_mask = fg_mask | ((vv >= fv1) & (vv < fv2) & (uu >= fu1) & (uu < fu2))
        return depth_maps, fg_mask

    def __call__(self, depth_logits, gt_boxes2d, num_gt_per_img, gt_center_depth):
        b, c, h, w = depth_logits.shape
        depth_maps, fg_mask = self._build_targets(
            gt_boxes2d, gt_center_depth, num_gt_per_img, b, h, w)
        weights = jnp.where(fg_mask, self.fg_weight, self.bg_weight).astype(jnp.float32)

        # ---- pixel tiling: big lane-dense tiles, classes on sublanes, no pads ----
        hw = h * w
        hwp = -(-hw // 128) * 128                 # lane-aligned upper bound
        tile_cap = 8192                           # safe on v7x's 64 MiB VMEM
        n_tiles = max(1, -(-hwp // tile_cap))
        if b * n_tiles < 2 and hwp >= 256:        # keep both v7x TensorCores busy
            n_tiles = 2
        tp = -(-hwp // (n_tiles * 128)) * 128     # tile pixels, multiple of 128

        logits3d = depth_logits.reshape(b, c, hw)  # free reshape: no transpose, no pad
        dw = jnp.stack([depth_maps.reshape(b, hw).astype(jnp.float32),
                        weights.reshape(b, hw)], axis=1)       # (B, 2, HW), no pad

        kernel = functools.partial(
            _ddn_loss_kernel,
            alpha=self.alpha, gamma=self.gamma,
            depth_min=self.depth_min, depth_max=self.depth_max,
            num_bins=self.num_bins, hw=hw, tp=tp)

        partials = pl.pallas_call(
            kernel,
            out_shape=jax.ShapeDtypeStruct((b * n_tiles, 8, 128), jnp.float32),
            grid_spec=pltpu.PrefetchScalarGridSpec(
                num_scalar_prefetch=0,
                grid=(b, n_tiles),
                in_specs=[
                    pl.BlockSpec((1, c, tp), lambda bi, pi: (bi, 0, pi)),
                    pl.BlockSpec((1, 2, tp), lambda bi, pi: (bi, 0, pi)),
                ],
                out_specs=pl.BlockSpec(
                    (1, 8, 128), lambda bi, pi: (bi * n_tiles + pi, 0, 0)),
            ),
            compiler_params=pltpu.CompilerParams(
                dimension_semantics=("parallel", "parallel"),
                vmem_limit_bytes=40 * 1024 * 1024),
        )(logits3d, dw)

        # Balancer: fg_loss + bg_loss == sum(weighted loss) / (#fg + #bg pixels)
        num_pixels = jnp.float32(b * h * w)
        return jnp.sum(partials[:, 0, 0]) / num_pixels


if __name__ == "__main__":
    key = jax.random.PRNGKey(0)
    B, H, W = 2, 16, 16
    NUM_BINS = 80
    C = NUM_BINS + 1
    NUM_GT_PER_IMG = 3

    k1, k2, k3, k4 = jax.random.split(key, 4)
    depth_logits = jax.random.normal(k1, (B, C, H, W), dtype=jnp.float32)

    # gt_boxes2d is the flat (B * N, 4) tensor that .split(num_gt_per_img) expects
    uv1 = jax.random.uniform(k2, (B * NUM_GT_PER_IMG, 2), minval=0.0, maxval=W / 2)
    wh = jax.random.uniform(k3, (B * NUM_GT_PER_IMG, 2), minval=2.0, maxval=W / 2)
    gt_boxes2d = jnp.concatenate([uv1, jnp.minimum(uv1 + wh, float(W - 1))], axis=1)
    gt_center_depth = jax.random.uniform(
        k4, (B * NUM_GT_PER_IMG,), minval=1.0, maxval=50.0)

    loss_mod = DDNLossPallas(alpha=0.25, gamma=2.0, fg_weight=13.0, bg_weight=1.0,
                             downsample_factor=1)
    out = loss_mod(depth_logits, gt_boxes2d, NUM_GT_PER_IMG, gt_center_depth)
    out = jax.block_until_ready(out)
    assert out.shape == () and bool(jnp.isfinite(out))
    # TODO(synk): FocalLoss is imported externally in otx; the kornia-style
    # multi-class focal loss used by MonoDETR is reproduced here.
    print("KERNEL_OK")
</pallas_src>

<mosaic_0001>
module attributes {stable_mosaic.version = 11 : i64} {
  func.func @_ddn_loss_kernel(%arg0: i32, %arg1: i32, %arg2: memref<1x81x256xf32, #tpu.memory_space<vmem>>, %arg3: memref<1x2x256xf32, #tpu.memory_space<vmem>>, %arg4: memref<1x8x128xf32, #tpu.memory_space<vmem>>) attributes {dimension_semantics = [#tpu.dimension_semantics<parallel>, #tpu.dimension_semantics<parallel>], iteration_bounds = array<i64: 2, 1>, scalar_prefetch = 0 : i64, scratch_operands = 0 : i64, tpu.core_type = #tpu.core_type<tc>, window_params = [{transform_indices = @transform_0, window_bounds = array<i64: 1, 81, 256>}, {transform_indices = @transform_1, window_bounds = array<i64: 1, 2, 256>}, {transform_indices = @transform_2, window_bounds = array<i64: 1, 8, 128>}]} {
    %c0 = arith.constant 0 : index
    %c0_0 = arith.constant 0 : index
    %c0_1 = arith.constant 0 : index
    %0 = vector.load %arg2[%c0, %c0_0, %c0_1] : memref<1x81x256xf32, #tpu.memory_space<vmem>>, vector<1x81x256xf32>
    %1 = vector.shape_cast %0 : vector<1x81x256xf32> to vector<81x256xf32>
    %c0_2 = arith.constant 0 : index
    %c0_3 = arith.constant 0 : index
    %c0_4 = arith.constant 0 : index
    %2 = vector.load %arg3[%c0_2, %c0_3, %c0_4] : memref<1x2x256xf32, #tpu.memory_space<vmem>>, vector<1x2x256xf32>
    %3 = vector.shape_cast %2 : vector<1x2x256xf32> to vector<2x256xf32>
    %4 = vector.extract_strided_slice %3 {offsets = [0, 0], sizes = [1, 256], strides = [1, 1]} : vector<2x256xf32> to vector<1x256xf32>
    %5 = vector.extract_strided_slice %3 {offsets = [1, 0], sizes = [1, 256], strides = [1, 1]} : vector<2x256xf32> to vector<1x256xf32>
    %c256_i32 = arith.constant 256 : i32
    %6 = arith.muli %arg1, %c256_i32 : i32
    %7 = tpu.iota {dimensions = array<i32: 1>} : vector<1x256xi32>
    %8 = vector.broadcast %6 : i32 to vector<1x256xi32>
    %9 = arith.addi %8, %7 : vector<1x256xi32>
    %c256_i32_5 = arith.constant 256 : i32
    %10 = vector.broadcast %c256_i32_5 : i32 to vector<1x256xi32>
    %11 = arith.cmpi slt, %9, %10 : vector<1x256xi32>
    %cst = arith.constant 1.000000e-03 : f32
    %12 = vector.broadcast %cst : f32 to vector<1x256xf32>
    %13 = arith.subf %4, %12 : vector<1x256xf32>
    %cst_6 = arith.constant 8.000000e+00 : f32
    %14 = vector.broadcast %cst_6 : f32 to vector<1x256xf32>
    %15 = arith.mulf %14, %13 : vector<1x256xf32>
    %cst_7 = arith.constant 0.0185182095 : f32
    %16 = vector.broadcast %cst_7 : f32 to vector<1x256xf32>
    %17 = arith.divf %15, %16 : vector<1x256xf32>
    %cst_8 = arith.constant 1.000000e+00 : f32
    %18 = vector.broadcast %cst_8 : f32 to vector<1x256xf32>
    %19 = arith.addf %18, %17 : vector<1x256xf32>
    %20 = math.sqrt %19 : vector<1x256xf32>
    %cst_9 = arith.constant 5.000000e-01 : f32
    %21 = vector.broadcast %cst_9 : f32 to vector<1x256xf32>
    %22 = arith.mulf %21, %20 : vector<1x256xf32>
    %cst_10 = arith.constant -5.000000e-01 : f32
    %23 = vector.broadcast %cst_10 : f32 to vector<1x256xf32>
    %24 = arith.addf %23, %22 : vector<1x256xf32>
    %cst_11 = arith.constant 0.000000e+00 : f32
    %25 = vector.broadcast %cst_11 : f32 to vector<1x256xf32>
    %26 = arith.cmpf olt, %24, %25 : vector<1x256xf32>
    %cst_12 = arith.constant 8.000000e+01 : f32
    %27 = vector.broadcast %cst_12 : f32 to vector<1x256xf32>
    %28 = arith.cmpf ogt, %24, %27 : vector<1x256xf32>
    %29 = arith.ori %26, %28 : vector<1x256xi1>
    %30 = tpu.weird %24 : vector<1x256xf32> -> vector<1x256xi1>
    %cst_13 = arith.constant dense<true> : vector<1x256xi1>
    %31 = arith.xori %30, %cst_13 : vector<1x256xi1>
    %cst_14 = arith.constant dense<true> : vector<1x256xi1>
    %32 = arith.xori %31, %cst_14 : vector<1x256xi1>
    %33 = arith.ori %29, %32 : vector<1x256xi1>
    %cst_15 = arith.constant 8.000000e+01 : f32
    %34 = vector.broadcast %cst_15 : f32 to vector<1x256xf32>
    %35 = arith.select %33, %34, %24 : vector<1x256xi1>, vector<1x256xf32>
    %36 = arith.fptosi %35 : vector<1x256xf32> to vector<1x256xi32>
    %cst_16 = arith.constant dense<0xFF800000> : vector<256xf32>
    %37 = vector.multi_reduction <maximumf>, %1, %cst_16 [0] : vector<81x256xf32> to vector<256xf32>
    %38 = vector.shape_cast %37 : vector<256xf32> to vector<1x256xf32>
    %39 = vector.broadcast %38 : vector<1x256xf32> to vector<81x256xf32>
    %40 = arith.subf %1, %39 : vector<81x256xf32>
    %41 = math.exp %40 : vector<81x256xf32>
    %cst_17 = arith.constant dense<0.000000e+00> : vector<256xf32>
    %42 = vector.multi_reduction <add>, %41, %cst_17 [0] : vector<81x256xf32> to vector<256xf32>
    %43 = vector.shape_cast %42 : vector<256xf32> to vector<1x256xf32>
    %44 = tpu.iota {dimensions = array<i32: 0>} : vector<81x1xi32>
    %45 = vector.broadcast %44 : vector<81x1xi32> to vector<81x256xi32>
    %46 = vector.broadcast %36 : vector<1x256xi32> to vector<81x256xi32>
    %47 = arith.cmpi eq, %45, %46 : vector<81x256xi32>
    %cst_18 = arith.constant 0.000000e+00 : f32
    %48 = vector.broadcast %cst_18 : f32 to vector<81x256xf32>
    %49 = arith.select %47, %1, %48 : vector<81x256xi1>, vector<81x256xf32>
    %cst_19 = arith.constant dense<0.000000e+00> : vector<256xf32>
    %50 = vector.multi_reduction <add>, %49, %cst_19 [0] : vector<81x256xf32> to vector<256xf32>
    %51 = vector.shape_cast %50 : vector<256xf32> to vector<1x256xf32>
    %52 = arith.subf %51, %38 : vector<1x256xf32>
    %53 = math.log %43 : vector<1x256xf32>
    %54 = arith.subf %52, %53 : vector<1x256xf32>
    %55 = math.exp %54 : vector<1x256xf32>
    %cst_20 = arith.constant 1.000000e+00 : f32
    %56 = vector.broadcast %cst_20 : f32 to vector<1x256xf32>
    %57 = arith.subf %56, %55 : vector<1x256xf32>
    %cst_21 = arith.constant 0.000000e+00 : f32
    %58 = vector.broadcast %cst_21 : f32 to vector<1x256xf32>
    %59 = arith.maximumf %57, %58 : vector<1x256xf32>
    %60 = arith.mulf %59, %59 : vector<1x256xf32>
    %cst_22 = arith.constant -2.500000e-01 : f32
    %61 = vector.broadcast %cst_22 : f32 to vector<1x256xf32>
    %62 = arith.mulf %61, %60 : vector<1x256xf32>
    %63 = arith.mulf %62, %54 : vector<1x256xf32>
    %64 = arith.mulf %63, %5 : vector<1x256xf32>
    %cst_23 = arith.constant 0.000000e+00 : f32
    %65 = vector.broadcast %cst_23 : f32 to vector<1x256xf32>
    %66 = arith.select %11, %64, %65 : vector<1x256xi1>, vector<1x256xf32>
    %67 = vector.shape_cast %66 : vector<1x256xf32> to vector<1x1x256xf32>
    %cst_24 = arith.constant dense<0.000000e+00> : vector<1xf32>
    %68 = vector.multi_reduction <add>, %67, %cst_24 [1, 2] : vector<1x1x256xf32> to vector<1xf32>
    %69 = vector.shape_cast %68 : vector<1xf32> to vector<1x1x1xf32>
    %70 = vector.extract %69[0, 0, 0] : f32 from vector<1x1x1xf32>
    %71 = vector.broadcast %70 : f32 to vector<1x1xf32>
    %72 = vector.shape_cast %71 : vector<1x1xf32> to vector<1x1x1xf32>
    %73 = vector.shape_cast %72 : vector<1x1x1xf32> to vector<1x1x1xf32>
    %74 = vector.broadcast %73 : vector<1x1x1xf32> to vector<1x8x128xf32>
    %c0_25 = arith.constant 0 : index
    %c0_26 = arith.constant 0 : index
    %c0_27 = arith.constant 0 : index
    %75 = vector.load %arg4[%c0_25, %c0_26, %c0_27] : memref<1x8x128xf32, #tpu.memory_space<vmem>>, vector<1x8x128xf32>
    tpu.vector_store %arg4[%c0_25, %c0_26, %c0_27], %74 {strides = array<i32>} : memref<1x8x128xf32, #tpu.memory_space<vmem>>, vector<1x8x128xf32>,
    return
  }
  func.func @transform_0(%arg0: i32, %arg1: i32) -> (i32, i32, i32) {
    %c0_i32 = arith.constant 0 : i32
    %c0_i32_0 = arith.constant 0 : i32
    return %arg0, %c0_i32, %arg1 : i32, i32, i32
  }
  func.func @transform_1(%arg0: i32, %arg1: i32) -> (i32, i32, i32) {
    %c0_i32 = arith.constant 0 : i32
    %c0_i32_0 = arith.constant 0 : i32
    return %arg0, %c0_i32, %arg1 : i32, i32, i32
  }
  func.func @transform_2(%arg0: i32, %arg1: i32) -> (i32, i32, i32) {
    %c1_i32 = arith.constant 1 : i32
    %0 = arith.muli %arg0, %c1_i32 : i32
    %1 = arith.addi %0, %arg1 : i32
    %c0_i32 = arith.constant 0 : i32
    %c0_i32_0 = arith.constant 0 : i32
    %c0_i32_1 = arith.constant 0 : i32
    return %1, %c0_i32, %c0_i32_0 : i32, i32, i32
  }
}

</mosaic_0001>

<llo_original>
// kernel: tpu_custom_call.1
$region0: #{tpu_custom_call.1}
  #allocation0 [shape = 'u32[]', space=smem, size = 0x4, offset = 0x4, fixed_abs, tag = 'smem constant byte address 0x4 - core index']
  #allocation1 [shape = 'u32[144,128]{1,0:T(1,128)}', space=vmem, size = 0x12000, scoped, tag = 'internal scratch']
  %s0 = inlined_call_operand.vmem [shape: f32[2,81,256], index: 0, kind: input, shape index: {}]
  %s1 = inlined_call_operand.vmem [shape: f32[2,2,256], index: 1, kind: input, shape index: {}]
  %s2 = inlined_call_operand.hbm [shape: f32[2,8,128], index: 2, kind: output, shape index: {}]
  %s3 = sld [smem:[#allocation0]]
  $region41: #{tpu_custom_call.1} parent=0
    _
  %s5 = ssub.s32 1, %s3
  %s6 = scalar_select 0, %s5, %s3
  $region1: #{tpu_custom_call.1} parent=0
    #allocation2 [shape = 'u8[8192]{0}', space=vmem, size = 0x2000, scoped, tag = 'output window, operand 0']
    #allocation3 [shape = 's32[2]{0}', space=sflag, size = 0x8, scoped, tag = 'scoped memory for tpu_custom_call.1']
    %7 = vsyncpa [#allocation3], 0
    %s8 = scalar_lea.sflag [#allocation3], 1
    %9 = vsyncpa %s8, 0
    loop: start=0, step=1, limit=4
    $region2: #{tpu_custom_call.1} parent=1 // loop_pre_header
      _
    $region3: #{tpu_custom_call.1} parent=1 // loop_header
      %s11 = sphi 0, %s15
      %p12 = scmp.ge.s32.totalorder %s11, 4
      %s18 = sphi 0, %s30
      %s19 = sphi 0, %s26
      %s20 = sphi 0, %s18
      %s21 = sphi 0, %s19
      %s22 = sphi 0, %s20
      %s23 = sphi 0, %s21
      %s35 = sphi 0, %s37
      %s38 = sphi 0, %s35
      %s39 = sphi 0, %s38
      %s55 = sphi 0, %s39
      %s63 = sphi 0, %s65
      %s66 = sphi 0, %s63
      %s67 = sphi 0, %s66
      %s83 = sphi 0, %s67
      %s91 = sphi 0, %s93
      %s94 = sphi 0, %s91
      %s95 = sphi 0, %s94
      %s111 = sphi 0, %s95
    $region4: #{tpu_custom_call.1} parent=1 // loop_header_branch
      %14 = sbr.rel (%p12) target = $region8
    $region5: #{tpu_custom_call.1} parent=1 // loop_body
      %s16 = ssub.s32 %s11, 1
      %s17 = ssub.s32 %s11, 2
      %s24 = sadd.s32 1, %s19
      %p25 = scmp.ge.s32.totalorder %s24, 1
      %s26 = scalar_select %p25, 0, %s24
      %s27 = sadd.s32 1, %s18
      %s28 = scalar_select %p25, %s27, %s18
      %p29 = scmp.ge.s32.totalorder %s28, 2
      %s30 = scalar_select %p29, 0, %s28
      %s31 = ssub.s32 %s18, %s30
      %s32 = ssub.s32 %s19, %s26
      %s33 = sor.u32 %s31, %s32
      %p34 = scmp.eq.s32.totalorder %s33, 0
      %s36 = sadd.s32 %s35, 1
      %s37 = scalar_select %p34, %s35, %s36
      %p40 = pneg %p34
      %p41 = scmp.eq.s32.totalorder %s11, 1
      %p42 = por %p40, %p41
      %p43 = scmp.ne.s32.totalorder %s35, %s38
      %p44 = scmp.eq.s32.totalorder %s11, 0
      %p45 = por %p43, %p44
      %p46 = scmp.ne.s32.totalorder %s35, %s38
      %p47 = scmp.eq.s32.totalorder %s16, 1
      %p48 = por %p46, %p47
      %p49 = scmp.ne.s32.totalorder %s38, %s39
      %p50 = scmp.eq.s32.totalorder %s16, 0
      %p51 = por %p49, %p50
      %p52 = scmp.ne.s32.totalorder %s38, %s39
      %p53 = scmp.eq.s32.totalorder %s17, 1
      %p54 = por %p52, %p53
      %p56 = scmp.ne.s32.totalorder %s39, %s55
      %p57 = scmp.eq.s32.totalorder %s17, 0
      %p58 = por %p56, %p57
      %s59 = ssub.s32 %s18, %s30
      %s60 = ssub.s32 %s19, %s26
      %s61 = sor.u32 %s59, %s60
      %p62 = scmp.eq.s32.totalorder %s61, 0
      %s64 = sadd.s32 %s63, 1
      %s65 = scalar_select %p62, %s63, %s64
      %p68 = pneg %p62
      %p69 = scmp.eq.s32.totalorder %s11, 1
      %p70 = por %p68, %p69
      %p71 = scmp.ne.s32.totalorder %s63, %s66
      %p72 = scmp.eq.s32.totalorder %s11, 0
      %p73 = por %p71, %p72
      %p74 = scmp.ne.s32.totalorder %s63, %s66
      %p75 = scmp.eq.s32.totalorder %s16, 1
      %p76 = por %p74, %p75
      %p77 = scmp.ne.s32.totalorder %s66, %s67
      %p78 = scmp.eq.s32.totalorder %s16, 0
      %p79 = por %p77, %p78
      %p80 = scmp.ne.s32.totalorder %s66, %s67
      %p81 = scmp.eq.s32.totalorder %s17, 1
      %p82 = por %p80, %p81
      %p84 = scmp.ne.s32.totalorder %s67, %s83
      %p85 = scmp.eq.s32.totalorder %s17, 0
      %p86 = por %p84, %p85
      %s87 = sadd.s32 %s18, %s19
      %s88 = sadd.s32 %s30, %s26
      %s89 = ssub.s32 %s87, %s88
      %p90 = scmp.eq.s32.totalorder %s89, 0
      %s92 = sadd.s32 %s91, 1
      %s93 = scalar_select %p90, %s91, %s92
      %p96 = pneg %p90
      %p97 = scmp.eq.s32.totalorder %s11, 1
      %p98 = por %p96, %p97
      %p99 = scmp.ne.s32.totalorder %s91, %s94
      %p100 = scmp.eq.s32.totalorder %s11, 0
      %p101 = por %p99, %p100
      %p102 = scmp.ne.s32.totalorder %s91, %s94
      %p103 = scmp.eq.s32.totalorder %s16, 1
      %p104 = por %p102, %p103
      %p105 = scmp.ne.s32.totalorder %s94, %s95
      %p106 = scmp.eq.s32.totalorder %s16, 0
      %p107 = por %p105, %p106
      %p108 = scmp.ne.s32.totalorder %s94, %s95
      %p109 = scmp.eq.s32.totalorder %s17, 1
      %p110 = por %p108, %p109
      %p112 = scmp.ne.s32.totalorder %s95, %s111
      %p113 = scmp.eq.s32.totalorder %s17, 0
      %p114 = por %p112, %p113
      %p115 = scmp.le.s32.totalorder 1, %s11
      %p116 = scmp.lt.s32.totalorder %s11, 3
      %p117 = pnand %p115, %p116
      %p118 = pneg %p117
      // Predicated region
      $region9: #{tpu_custom_call.1} parent=5 // pred_check
        _
      $region10: #{tpu_custom_call.1} parent=5 // pred_check_branch
        %120 = sbr.rel (%p117) target = $region12
      $region11: #{tpu_custom_call.1} parent=5 // pred_region
        %s121 = ssub.s32 %s11, 1
      $region12: #{tpu_custom_call.1} parent=5 // pred_fallthru
        _
      %p122 = scmp.lt.s32.totalorder %s11, 2
      // Predicated region
      $region13: #{tpu_custom_call.1} parent=5 // pred_check
        %p123 = pneg %p122
      $region14: #{tpu_custom_call.1} parent=5 // pred_check_branch
        %125 = sbr.rel (%p123) target = $region16
      $region15: #{tpu_custom_call.1} parent=5 // pred_region
        // Predicated region
        $region17: #{tpu_custom_call.1} parent=15 // pred_check
          %p126 = pneg %p45
        $region18: #{tpu_custom_call.1} parent=15 // pred_check_branch
          %128 = sbr.rel (%p126) target = $region20
        $region19: #{tpu_custom_call.1} parent=15 // pred_region
          %s129 = smul.u32 2, %s19
          %p130 = scmp.lt.s32.totalorder %s18, 1
          %s131 = scalar_select %p130, %s18, 1
          %p132 = scmp.lt.s32.totalorder %s129, 1
          %s133 = scalar_select %p132, %s129, 1
          %s134 = smul.addr %s131, 22
          %s135 = sadd.s32 %s133, %s134
          %s136 = smul.addr %s135, 8
          %s137 = scalar_lea.vmem %s0, %s136
          %s138 = smul.u32 2, %s19
        $region20: #{tpu_custom_call.1} parent=15 // pred_fallthru
          _
        // Predicated region
        $region21: #{tpu_custom_call.1} parent=15 // pred_check
          %p139 = pneg %p73
        $region22: #{tpu_custom_call.1} parent=15 // pred_check_branch
          %141 = sbr.rel (%p139) target = $region24
        $region23: #{tpu_custom_call.1} parent=15 // pred_region
          %s142 = smul.u32 2, %s19
          %p143 = scmp.lt.s32.totalorder %s18, 1
          %s144 = scalar_select %p143, %s18, 1
          %p145 = scmp.lt.s32.totalorder %s142, 1
          %s146 = scalar_select %p145, %s142, 1
          %s147 = smul.addr %s144, 2
          %s148 = sadd.s32 %s146, %s147
          %s149 = smul.addr %s148, 2
          %s150 = scalar_lea.vmem %s1, %s149
          %s151 = smul.u32 2, %s19
        $region24: #{tpu_custom_call.1} parent=15 // pred_fallthru
          _
      $region16: #{tpu_custom_call.1} parent=5 // pred_fallthru
        _
      %p152 = scmp.le.s32.totalorder 1, %s11
      %p153 = scmp.lt.s32.totalorder %s11, 3
      %p154 = pnand %p152, %p153
      %p155 = pneg %p154
      // Predicated region
      $region25: #{tpu_custom_call.1} parent=5 // pred_check
        _
      $region26: #{tpu_custom_call.1} parent=5 // pred_check_branch
        %157 = sbr.rel (%p154) target = $region28
      $region27: #{tpu_custom_call.1} parent=5 // pred_region
        %s158 = ssub.s32 %s11, 1
        %s159 = smul.u32 2, %s21
        %p160 = scmp.lt.s32.totalorder %s20, 1
        %s161 = scalar_select %p160, %s20, 1
        %p162 = scmp.lt.s32.totalorder %s159, 1
        %s163 = scalar_select %p162, %s159, 1
        %s164 = smul.addr %s161, 22
        %s165 = sadd.s32 %s163, %s164
        %s166 = smul.addr %s165, 8
        %s167 = scalar_lea.vmem %s0, %s166
        %p168 = pneg %p51
        %p169 = pneg %p48
        %s170 = smul.u32 2, %s21
        %p171 = scmp.lt.s32.totalorder %s20, 1
        %s172 = scalar_select %p171, %s20, 1
        %p173 = scmp.lt.s32.totalorder %s170, 1
        %s174 = scalar_select %p173, %s170, 1
        %s175 = smul.addr %s172, 2
        %s176 = sadd.s32 %s174, %s175
        %s177 = smul.addr %s176, 2
        %s178 = scalar_lea.vmem %s1, %s177
        %p179 = pneg %p79
        %p180 = pneg %p76
        %p181 = pneg %p107
        %p182 = pneg %p104
        %s183 = sand.u32 %s94, 1
        %s184 = scalar_lea.sflag [#allocation3], %s183
        %s185 = sand.u32 %s94, 1
        %s186 = smul.addr %s185, 8
        %s187 = scalar_lea.vmem [#allocation2], %s186
        %s188 = smul.u32 2, %s21
        %p189 = scmp.lt.s32.totalorder %s20, 1
        %s190 = scalar_select %p189, %s20, 1
        %p191 = scmp.lt.s32.totalorder %s188, 1
        %s192 = scalar_select %p191, %s188, 1
        %s193 = smul.addr %s190, 22
        %s194 = sadd.s32 %s192, %s193
        %s195 = smul.addr %s194, 8
        %s196 = scalar_lea.vmem %s0, %s195
        %s197 = smul.u32 2, %s21
        %s198 = smul.u32 2, %s21
        %p199 = scmp.lt.s32.totalorder %s20, 1
        %s200 = scalar_select %p199, %s20, 1
        %p201 = scmp.lt.s32.totalorder %s198, 1
        %s202 = scalar_select %p201, %s198, 1
        %s203 = smul.addr %s200, 2
        %s204 = sadd.s32 %s202, %s203
        %s205 = smul.addr %s204, 2
        %s206 = scalar_lea.vmem %s1, %s205
        %s207 = smul.u32 2, %s21
        %s208 = sadd.s32 %s20, %s21
        %v209 = vld [vmem:[%s196] sm:$0xff]
        %v210 = vld [vmem:[%s196 + $0x8] sm:$0xff]
        %v211 = vld [vmem:[%s196 + $0x10] sm:$0xff]
        %v212 = vld [vmem:[%s196 + $0x18] sm:$0xff]
        %v213 = vld [vmem:[%s196 + $0x20] sm:$0xff]
        %v214 = vld [vmem:[%s196 + $0x28] sm:$0xff]
        %v215 = vld [vmem:[%s196 + $0x30] sm:$0xff]
        %v216 = vld [vmem:[%s196 + $0x38] sm:$0xff]
        %v217 = vld [vmem:[%s196 + $0x40] sm:$0xff]
        %v218 = vld [vmem:[%s196 + $0x48] sm:$0xff]
        %v219 = vld [vmem:[%s196 + $0x50] sm:$0xff]
        %v220 = vld [vmem:[%s196 + $0x58] sm:$0xff]
        %v221 = vld [vmem:[%s196 + $0x60] sm:$0xff]
        %v222 = vld [vmem:[%s196 + $0x68] sm:$0xff]
        %v223 = vld [vmem:[%s196 + $0x70] sm:$0xff]
        %v224 = vld [vmem:[%s196 + $0x78] sm:$0xff]
        %v225 = vld [vmem:[%s196 + $0x80] sm:$0xff]
        %v226 = vld [vmem:[%s196 + $0x88] sm:$0xff]
        %v227 = vld [vmem:[%s196 + $0x90] sm:$0xff]
        %v228 = vld [vmem:[%s196 + $0x98] sm:$0xff]
        %v229 = vld [vmem:[%s196 + $0xa0] sm:$0x1]
        %v230 = vld [vmem:[%s196 + $0xa8] sm:$0x1]
        %v231 = vld [vmem:[%s206] sm:$0xf]
        %s232 = smul.u32 %s21, 256
        %v233 = vlaneseq
        %v234 = vand.u32 %v233, 127
        %v235 = vadd.s32 %v234, 128
        %v236 = vstv %s232
        %v237 = vadd.s32 %v236, %v234
        %v238 = vadd.s32 %v236, %v235
        %vm239 = vcmp.lt.s32.totalorder %v237, 256
        %vm240 = vcmp.lt.s32.totalorder %v238, 256
        %v241 = vsub.f32 %v231, 0.001
        %v242 = vmul.f32 %v241, 8.0
        %v243 = vrcp.pop 0.01851821
        %v244 = vmul.f32 %v242, %v243
        %v245 = vadd.f32 %v244, 1.0
        %v246 = vrsqrt.pop %v245
        %v247 = vmul.f32 %v245, %v246
        %vm248 = vcmp.eq.f32.partialorder %v245, inf
        %v249 = vsel %vm248, %v245, %v247
        %vm250 = vcmp.eq.f32.partialorder %v245, 0.0
        %v251 = vand.u32 %v245, 2147483648
        %v252 = vsel %vm250, %v251, %v249
        %v253 = vmul.f32 %v252, 0.5
        %v254 = vadd.f32 %v253, -0.5
        %vm255 = vcmp.lt.f32.partialorder %v254, 0.0
        %vm256 = vcmp.gt.f32.partialorder %v254, 80.0
        %vm257 = vmor %vm255, %vm256
        %vm258 = vweird.f32 %v254
        %vm259 = vmor %vm257, %vm258
        %v260 = vsel %vm259, 80.0, %v254
        %v261 = vcvt.f32.s32.to.zero.pseudo %v260
        %v262 = vmax.f32 %v209, %v213
        %v263 = vmax.f32 %v211, %v215
        %v264 = vmax.f32 %v262, %v217
        %v265 = vmax.f32 %v263, %v219
        %v266 = vmax.f32 %v264, %v221
        %v267 = vmax.f32 %v265, %v223
        %v268 = vmax.f32 %v266, %v225
        %v269 = vmax.f32 %v267, %v227
        %vm270 = vcmask 1040384
        %v271 = vsel %vm270, %v229, -inf
        %v272 = vmax.f32 %v268, %v271
        %v273 = vmax.f32 %v272, %v269
        %v274 = vrot.slane %v273, 4
        %v275 = vmax.f32 %v273, %v274
        %v276 = vrot.slane %v275, 2
        %v277 = vmax.f32 %v275, %v276
        %v278 = vrot.slane %v277, 1
        %v279 = vmax.f32 %v277, %v278
        %v280 = vmax.f32 %v210, %v214
        %v281 = vmax.f32 %v212, %v216
        %v282 = vmax.f32 %v280, %v218
        %v283 = vmax.f32 %v281, %v220
        %v284 = vmax.f32 %v282, %v222
        %v285 = vmax.f32 %v283, %v224
        %v286 = vmax.f32 %v284, %v226
        %v287 = vmax.f32 %v285, %v228
        %v288 = vsel %vm270, %v230, -inf
        %v289 = vmax.f32 %v286, %v288
        %v290 = vmax.f32 %v289, %v287
        %v291 = vrot.slane %v290, 4
        %v292 = vmax.f32 %v290, %v291
        %v293 = vrot.slane %v292, 2
        %v294 = vmax.f32 %v292, %v293
        %v295 = vrot.slane %v294, 1
        %v296 = vmax.f32 %v294, %v295
        %v297 = vsub.f32 %v209, %v279
        %v298 = vsub.f32 %v210, %v296
        %v299 = vsub.f32 %v211, %v279
        %v300 = vsub.f32 %v212, %v296
        %v301 = vsub.f32 %v213, %v279
        %v302 = vsub.f32 %v214, %v296
        %v303 = vsub.f32 %v215, %v279
        %v304 = vsub.f32 %v216, %v296
        %v305 = vsub.f32 %v217, %v279
        %v306 = vsub.f32 %v218, %v296
        %v307 = vsub.f32 %v219, %v279
        %v308 = vsub.f32 %v220, %v296
        %v309 = vsub.f32 %v221, %v279
        %v310 = vsub.f32 %v222, %v296
        %v311 = vsub.f32 %v223, %v279
        %v312 = vsub.f32 %v224, %v296
        %v313 = vsub.f32 %v225, %v279
        %v314 = vsub.f32 %v226, %v296
        %v315 = vsub.f32 %v227, %v279
        %v316 = vsub.f32 %v228, %v296
        %v317 = vsub.f32 %v229, %v279
        %v318 = vsub.f32 %v230, %v296
        %v319 = vmul.f32 %v297, 1.442695
        %v320 = vpow.pop %v319
        %v321 = vmul.f32 %v298, 1.442695
        %v322 = vpow.pop %v321
        %v323 = vmul.f32 %v299, 1.442695
        %v324 = vpow.pop %v323
        %v325 = vmul.f32 %v300, 1.442695
        %v326 = vpow.pop %v325
        %v327 = vmul.f32 %v301, 1.442695
        %v328 = vpow.pop %v327
        %v329 = vmul.f32 %v302, 1.442695
        %v330 = vpow.pop %v329
        %v331 = vmul.f32 %v303, 1.442695
        %v332 = vpow.pop %v331
        %v333 = vmul.f32 %v304, 1.442695
        %v334 = vpow.pop %v333
        %v335 = vmul.f32 %v305, 1.442695
        %v336 = vpow.pop %v335
        %v337 = vmul.f32 %v306, 1.442695
        %v338 = vpow.pop %v337
        %v339 = vmul.f32 %v307, 1.442695
        %v340 = vpow.pop %v339
        %v341 = vmul.f32 %v308, 1.442695
        %v342 = vpow.pop %v341
        %v343 = vmul.f32 %v309, 1.442695
        %v344 = vpow.pop %v343
        %v345 = vmul.f32 %v310, 1.442695
        %v346 = vpow.pop %v345
        %v347 = vmul.f32 %v311, 1.442695
        %v348 = vpow.pop %v347
        %v349 = vmul.f32 %v312, 1.442695
        %v350 = vpow.pop %v349
        %v351 = vmul.f32 %v313, 1.442695
        %v352 = vpow.pop %v351
        %v353 = vmul.f32 %v314, 1.442695
        %v354 = vpow.pop %v353
        %v355 = vmul.f32 %v315, 1.442695
        %v356 = vpow.pop %v355
        %v357 = vmul.f32 %v316, 1.442695
        %v358 = vpow.pop %v357
        %v359 = vmul.f32 %v317, 1.442695
        %v360 = vpow.pop %v359
        %v361 = vmul.f32 %v318, 1.442695
        %v362 = vpow.pop %v361
        %v363 = vadd.f32 %v320, %v324
        %v364 = vadd.f32 %v363, %v328
        %v365 = vadd.f32 %v364, %v332
        %v366 = vadd.f32 %v365, %v336
        %v367 = vadd.f32 %v366, %v340
        %v368 = vadd.f32 %v367, %v344
        %v369 = vadd.f32 %v368, %v348
        %v370 = vadd.f32 %v369, %v352
        %v371 = vadd.f32 %v370, %v356
        %v372 = vsel %vm270, %v360, 0.0
        %v373 = vadd.f32 %v371, %v372
        %v374 = vrot.slane %v373, 4
        %v375 = vadd.f32 %v373, %v374
        %v376 = vrot.slane %v375, 2
        %v377 = vadd.f32 %v375, %v376
        %v378 = vrot.slane %v377, 1
        %v379 = vadd.f32 %v377, %v378
        %v380 = vadd.f32 %v322, %v326
        %v381 = vadd.f32 %v380, %v330
        %v382 = vadd.f32 %v381, %v334
        %v383 = vadd.f32 %v382, %v338
        %v384 = vadd.f32 %v383, %v342
        %v385 = vadd.f32 %v384, %v346
        %v386 = vadd.f32 %v385, %v350
        %v387 = vadd.f32 %v386, %v354
        %v388 = vadd.f32 %v387, %v358
        %v389 = vsel %vm270, %v362, 0.0
        %v390 = vadd.f32 %v388, %v389
        %v391 = vrot.slane %v390, 4
        %v392 = vadd.f32 %v390, %v391
        %v393 = vrot.slane %v392, 2
        %v394 = vadd.f32 %v392, %v393
        %v395 = vrot.slane %v394, 1
        %v396 = vadd.f32 %v394, %v395
        %v397 = vlaneseq
        %v398 = vshrl.u32 %v397, 7
        %v399 = vadd.s32 %v398, 8
        %v400 = vadd.s32 %v398, 16
        %v401 = vadd.s32 %v398, 24
        %v402 = vadd.s32 %v398, 32
        %v403 = vadd.s32 %v398, 40
        %v404 = vadd.s32 %v398, 48
        %v405 = vadd.s32 %v398, 56
        %v406 = vadd.s32 %v398, 64
        %v407 = vadd.s32 %v398, 72
        %v408 = vadd.s32 %v398, 80
        %v409 = vlaneseq
        %v410 = vshrl.u32 %v409, 7
        %v411 = vsub.s32 0, %v410
        %v412 = vrot.slane %v261, %v411
        %v413 = vlaneseq
        %v414 = vshrl.u32 %v413, 7
        %v415 = vsub.s32 2, %v414
        %v416 = vrot.slane %v261, %v415
        %v417 = vlaneseq
        %v418 = vshrl.u32 %v417, 7
        %v419 = vsub.s32 0, %v418
        %v420 = vrot.slane %v412, %v419
        %v421 = vlaneseq
        %v422 = vshrl.u32 %v421, 7
        %v423 = vsub.s32 0, %v422
        %v424 = vrot.slane %v416, %v423
        %vm425 = vcmp.eq.s32.totalorder %v398, %v420
        %vm426 = vcmp.eq.s32.totalorder %v398, %v424
        %vm427 = vcmp.eq.s32.totalorder %v399, %v420
        %vm428 = vcmp.eq.s32.totalorder %v399, %v424
        %vm429 = vcmp.eq.s32.totalorder %v400, %v420
        %vm430 = vcmp.eq.s32.totalorder %v400, %v424
        %vm431 = vcmp.eq.s32.totalorder %v401, %v420
        %vm432 = vcmp.eq.s32.totalorder %v401, %v424
        %vm433 = vcmp.eq.s32.totalorder %v402, %v420
        %vm434 = vcmp.eq.s32.totalorder %v402, %v424
        %vm435 = vcmp.eq.s32.totalorder %v403, %v420
        %vm436 = vcmp.eq.s32.totalorder %v403, %v424
        %vm437 = vcmp.eq.s32.totalorder %v404, %v420
        %vm438 = vcmp.eq.s32.totalorder %v404, %v424
        %vm439 = vcmp.eq.s32.totalorder %v405, %v420
        %vm440 = vcmp.eq.s32.totalorder %v405, %v424
        %vm441 = vcmp.eq.s32.totalorder %v406, %v420
        %vm442 = vcmp.eq.s32.totalorder %v406, %v424
        %vm443 = vcmp.eq.s32.totalorder %v407, %v420
        %vm444 = vcmp.eq.s32.totalorder %v407, %v424
        %vm445 = vcmp.eq.s32.totalorder %v408, %v420
        %vm446 = vcmp.eq.s32.totalorder %v408, %v424
        %v447 = vsel %vm425, %v209, 0.0
        %v448 = vsel %vm426, %v210, 0.0
        %v449 = vsel %vm427, %v211, 0.0
        %v450 = vsel %vm428, %v212, 0.0
        %v451 = vsel %vm429, %v213, 0.0
        %v452 = vsel %vm430, %v214, 0.0
        %v453 = vsel %vm431, %v215, 0.0
        %v454 = vsel %vm432, %v216, 0.0
        %v455 = vsel %vm433, %v217, 0.0
        %v456 = vsel %vm434, %v218, 0.0
        %v457 = vsel %vm435, %v219, 0.0
        %v458 = vsel %vm436, %v220, 0.0
        %v459 = vsel %vm437, %v221, 0.0
        %v460 = vsel %vm438, %v222, 0.0
        %v461 = vsel %vm439, %v223, 0.0
        %v462 = vsel %vm440, %v224, 0.0
        %v463 = vsel %vm441, %v225, 0.0
        %v464 = vsel %vm442, %v226, 0.0
        %v465 = vsel %vm443, %v227, 0.0
        %v466 = vsel %vm444, %v228, 0.0
        %v467 = vsel %vm445, %v229, 0.0
        %v468 = vsel %vm446, %v230, 0.0
        %v469 = vadd.f32 %v447, %v449
        %v470 = vadd.f32 %v469, %v451
        %v471 = vadd.f32 %v470, %v453
        %v472 = vadd.f32 %v471, %v455
        %v473 = vadd.f32 %v472, %v457
        %v474 = vadd.f32 %v473, %v459
        %v475 = vadd.f32 %v474, %v461
        %v476 = vadd.f32 %v475, %v463
        %v477 = vadd.f32 %v476, %v465
        %v478 = vsel %vm270, %v467, 0.0
        %v479 = vadd.f32 %v477, %v478
        %v480 = vrot.slane %v479, 4
        %v481 = vadd.f32 %v479, %v480
        %v482 = vrot.slane %v481, 2
        %v483 = vadd.f32 %v481, %v482
        %v484 = vrot.slane %v483, 1
        %v485 = vadd.f32 %v483, %v484
        %v486 = vadd.f32 %v448, %v450
        %v487 = vadd.f32 %v486, %v452
        %v488 = vadd.f32 %v487, %v454
        %v489 = vadd.f32 %v488, %v456
        %v490 = vadd.f32 %v489, %v458
        %v491 = vadd.f32 %v490, %v460
        %v492 = vadd.f32 %v491, %v462
        %v493 = vadd.f32 %v492, %v464
        %v494 = vadd.f32 %v493, %v466
        %v495 = vsel %vm270, %v468, 0.0
        %v496 = vadd.f32 %v494, %v495
        %v497 = vrot.slane %v496, 4
        %v498 = vadd.f32 %v496, %v497
        %v499 = vrot.slane %v498, 2
        %v500 = vadd.f32 %v498, %v499
        %v501 = vrot.slane %v500, 1
        %v502 = vadd.f32 %v500, %v501
        %v503 = vsub.f32 %v485, %v279
        %v504 = vsub.f32 %v502, %v296
        %v505 = vlog2.pop %v379
        %v506 = vmul.f32 %v505, 0.6931472
        %v507 = vlog2.pop %v396
        %v508 = vmul.f32 %v507, 0.6931472
        %v509 = vsub.f32 %v503, %v506
        %v510 = vsub.f32 %v504, %v508
        %v511 = vmul.f32 %v509, 1.442695
        %v512 = vpow.pop %v511
        %v513 = vmul.f32 %v510, 1.442695
        %v514 = vpow.pop %v513
        %v515 = vsub.f32 1.0, %v512
        %v516 = vsub.f32 1.0, %v514
        %v517 = vmax.f32 %v515, 0.0
        %v518 = vmax.f32 %v516, 0.0
        %v519 = vmul.f32 %v517, %v517
        %v520 = vmul.f32 %v518, %v518
        %v521 = vmul.f32 %v519, -0.25
        %v522 = vmul.f32 %v520, -0.25
        %v523 = vmul.f32 %v521, %v509
        %v524 = vmul.f32 %v522, %v510
        %v526 = vlaneseq
        %v527 = vshrl.u32 %v526, 7
        %v528 = vsub.s32 1, %v527
        %v529 = vrot.slane %v231, %v528
        %v530 = vlaneseq
        %v531 = vshrl.u32 %v530, 7
        %v532 = vsub.s32 3, %v531
        %v533 = vrot.slane %v231, %v532
        %v536 = vmul.f32 %v523, %v529
        %v537 = vmul.f32 %v524, %v533
        %v538 = vsel %vm239, %v536, 0.0
        %v539 = vsel %vm240, %v537, 0.0
        %v540 = vsel %vm270, %v538, 0.0
        %v541 = vsel %vm270, %v539, 0.0
        %v542 = vadd.f32 %v540, %v541
        %543 = vadd.xlane.f32.xlu0 %v542
        %v544 = vpop.xlane.xlu0 %543
        %v545 = vrot.slane %v544, 4
        %v546 = vadd.f32 %v544, %v545
        %v547 = vrot.slane %v546, 2
        %v548 = vadd.f32 %v546, %v547
        %v549 = vrot.slane %v548, 1
        %v550 = vadd.f32 %v548, %v549
        %s551 = vtos %v550
        %v552 = vstv %s551
        %553 = vst [vmem:[%s187] sm:$0xff] %v552
        %s554 = sand.u32 %s94, 1
        %s555 = scalar_lea.sflag [#allocation3], %s554
        %s556 = sand.u32 %s94, 1
        %s557 = smul.addr %s556, 8
        %s558 = scalar_lea.vmem [#allocation2], %s557
        // Predicated region
        $region29: #{tpu_custom_call.1} parent=27 // pred_check
          %p559 = pneg %p104
        $region30: #{tpu_custom_call.1} parent=27 // pred_check_branch
          %561 = sbr.rel (%p559) target = $region32
        $region31: #{tpu_custom_call.1} parent=27 // pred_region
          %s562 = sadd.s32 %s20, %s21
          %s564 = ssub.s32 128, 128
          %565 = vsyncadd %s555, %s564
          %s566 = smul.addr %s562, 128
          %s567 = scalar_lea.hbm %s2, %s566
          %s569 = sshll.u32 %s558, 4
          %s570 = int_to_ptr.vmem [resolvable:$true] %s569
          %572 = dma.vmem_to_hbm [thread:$0]  %s570, 128, %s567, %s555
        $region32: #{tpu_custom_call.1} parent=27 // pred_fallthru
          _
      $region28: #{tpu_custom_call.1} parent=5 // pred_fallthru
        _
      %p573 = scmp.le.s32.totalorder 2, %s11
      // Predicated region
      $region33: #{tpu_custom_call.1} parent=5 // pred_check
        %p574 = pneg %p573
      $region34: #{tpu_custom_call.1} parent=5 // pred_check_branch
        %576 = sbr.rel (%p574) target = $region36
      $region35: #{tpu_custom_call.1} parent=5 // pred_region
        %s577 = ssub.s32 %s11, 2
        // Predicated region
        $region37: #{tpu_custom_call.1} parent=35 // pred_check
          %p578 = pneg %p110
        $region38: #{tpu_custom_call.1} parent=35 // pred_check_branch
          %580 = sbr.rel (%p578) target = $region40
        $region39: #{tpu_custom_call.1} parent=35 // pred_region
          %s581 = sand.u32 %s95, 1
          %s582 = scalar_lea.sflag [#allocation3], %s581
          %s583 = sand.u32 %s95, 1
          %s584 = smul.addr %s583, 8
          %s585 = scalar_lea.vmem [#allocation2], %s584
          %586 = dma.done %s582, 128
        $region40: #{tpu_custom_call.1} parent=35 // pred_fallthru
          _
      $region36: #{tpu_custom_call.1} parent=5 // pred_fallthru
        _
    $region6: #{tpu_custom_call.1} parent=1 // loop_footer
      %s15 = sadd.s32 1, %s11
    $region7: #{tpu_custom_call.1} parent=1 // loop_footer_branch
      %10 = sbr.rel target = $region3
    $region8: #{tpu_custom_call.1} parent=1 // loop_exit
      _
    %587 = vsyncpa [#allocation3], 1
    %s588 = scalar_lea.sflag [#allocation3], 1
    %589 = vsyncpa %s588, 1

</llo_original>
